<compile_context>
chip_gen: v6e
topology: v6e:2x2x1
jax: 0.10.0
libtpu: 0.0.40
codegen_flags: <defaults>
</compile_context>

<pallas_src>
import jax
import jax.numpy as jnp
from jax.experimental import pallas as pl
from jax.experimental.pallas import tpu as pltpu

IN_FEATURES = 3
OUT_FEATURES = 3
LANES = 128      # vreg lane width
SUBLANES = 8     # vreg sublane depth for f32


def _round_up(n, m):
    return ((n + m - 1) // m) * m


def _linear3_kernel(x_ref, w_ref, b_ref, o_ref):
    # x_ref: (IN, S, 128)  VMEM  - batch tiled over (sublane, lane), fully dense vregs
    # w_ref: (OUT, IN)     SMEM  - scalar weights
    # b_ref: (OUT,)        SMEM  - scalar bias
    # o_ref: (OUT, S, 128) VMEM
    xs = [x_ref[i] for i in range(IN_FEATURES)]      # hoisted: 3 plane loads total
    for o in range(OUT_FEATURES):
        acc = w_ref[o, 0] * xs[0]                    # unrolled K=3 scalar*vector FMAs (VPU)
        for i in range(1, IN_FEATURES):
            acc = acc + w_ref[o, i] * xs[i]
        o_ref[o] = acc + b_ref[o]                    # one full-plane unmasked store


def _linear3_call(x3, weight, bias, *, block_rows):
    """Core pallas_call: x3 (IN, R, 128) f32 -> (OUT, R, 128) f32."""
    _, R, lanes = x3.shape
    assert lanes == LANES
    assert block_rows % SUBLANES == 0
    num_blocks = pl.cdiv(R, block_rows)
    return pl.pallas_call(
        _linear3_kernel,
        out_shape=jax.ShapeDtypeStruct((OUT_FEATURES, R, LANES), x3.dtype),
        grid=(num_blocks,),
        in_specs=[
            # Lane+sublane-dense batch tile; contiguous HBM DMA per block.
            pl.BlockSpec((IN_FEATURES, block_rows, LANES), lambda r: (0, r, 0)),
            # Tiny parameters as SMEM scalars (no padded VMEM tiles).
            pl.BlockSpec((OUT_FEATURES, IN_FEATURES), lambda r: (0, 0),
                         memory_space=pltpu.MemorySpace.SMEM),
            pl.BlockSpec((OUT_FEATURES,), lambda r: (0,),
                         memory_space=pltpu.MemorySpace.SMEM),
        ],
        out_specs=pl.BlockSpec((OUT_FEATURES, block_rows, LANES),
                               lambda r: (0, r, 0)),
        compiler_params=pltpu.CompilerParams(
            dimension_semantics=("parallel",)),  # batch grid splits across v7x's 2 TCs
    )(x3, weight, bias)


def _pick_block_rows(R, max_block_rows):
    """Sublane-rows per block: multiple of 8, big enough to amortize per-step
    overhead, and <= ceil(R/2) so the grid has >= 2 steps whenever R > 8."""
    return max(SUBLANES, min(max_block_rows, _round_up(pl.cdiv(R, 2), SUBLANES)))


def linear_feature_major(x3, weight, bias, *, max_block_rows=512):
    """Zero-wrapper-copy fast path.

    x3: (IN, R, 128) f32 batch-tiled feature-major (R % 8 == 0) -> (OUT, R, 128).
    A surrounding model should produce/consume this layout directly so no
    transpose/pad/reshape traffic exists outside the kernel.
    """
    R = x3.shape[1]
    assert R % SUBLANES == 0
    S = _pick_block_rows(R, max_block_rows)
    # If S does not divide R, Pallas masks the ragged last block's writes.
    return _linear3_call(x3, weight, bias, block_rows=S)


def linear_pallas(x, weight, bias, *, max_block_rows=512):
    """Module-faithful interface: x (B, IN) f32 -> (B, OUT) f32.

    The (B, 3) <-> (3, R, 128) relayout each way is one fused XLA copy; jnp.pad
    only appears (fused with that copy) when the batch is ragged.  Use
    `linear_feature_major` from a surrounding model to avoid even that.
    """
    B = x.shape[0]
    R = pl.cdiv(B, LANES)
    S = _pick_block_rows(R, max_block_rows)
    Rp = _round_up(R, S)            # pad so every grid block divides exactly
    Bp = Rp * LANES

    x_fm = x.T                                        # (IN, B)
    if Bp != B:
        # Tail-only logical padding; XLA fuses it with the transpose copy.
        x_fm = jnp.pad(x_fm, ((0, 0), (0, Bp - B)))
    x3 = x_fm.reshape(IN_FEATURES, Rp, LANES)         # batch -> (sublane, lane) tiles

    y3 = _linear3_call(x3, weight, bias, block_rows=S)

    # Back to the PyTorch (B, OUT) layout, dropping the lane/sublane padding.
    return y3.reshape(OUT_FEATURES, Bp)[:, :B].T


if __name__ == "__main__":
    key = jax.random.PRNGKey(0)
    kx, kw, kb, kx2, kx3, kx4 = jax.random.split(key, 6)

    # Deterministic parameter init (mirrors nn.Linear's uniform(-1/sqrt(in), 1/sqrt(in)))
    bound = 1.0 / jnp.sqrt(jnp.float32(IN_FEATURES))
    weight = jax.random.uniform(kw, (OUT_FEATURES, IN_FEATURES),
                                jnp.float32, -bound, bound)
    bias = jax.random.uniform(kb, (OUT_FEATURES,),
                              jnp.float32, -bound, bound)

    # 1) Module-faithful interface, tiny batch (the tutorial feeds (B, 3)).
    x = jax.random.normal(kx, (8, IN_FEATURES), dtype=jnp.float32)
    y = jax.block_until_ready(linear_pallas(x, weight, bias))
    assert y.shape == (8, OUT_FEATURES)
    assert jnp.allclose(y, x @ weight.T + bias, atol=1e-5, rtol=1e-5)

    # 2) Ragged batch (exercises the tail-padding path).
    x2 = jax.random.normal(kx2, (300, IN_FEATURES), dtype=jnp.float32)
    y2 = jax.block_until_ready(linear_pallas(x2, weight, bias))
    assert jnp.allclose(y2, x2 @ weight.T + bias, atol=1e-5, rtol=1e-5)

    # 3) Larger batch -> multi-block "parallel" grid through the torch interface.
    x4 = jax.random.normal(kx4, (2560, IN_FEATURES), dtype=jnp.float32)
    y4 = jax.block_until_ready(linear_pallas(x4, weight, bias))
    assert jnp.allclose(y4, x4 @ weight.T + bias, atol=1e-5, rtol=1e-5)

    # 4) Zero-copy feature-major fast path, 2 grid blocks (v7x megacore split).
    x3 = jax.random.normal(kx3, (IN_FEATURES, 16, LANES), dtype=jnp.float32)
    y3 = jax.block_until_ready(linear_feature_major(x3, weight, bias))
    ref3 = jnp.einsum("oi,irl->orl", weight, x3) + bias[:, None, None]
    assert jnp.allclose(y3, ref3, atol=1e-5, rtol=1e-5)

    print("KERNEL_OK")
</pallas_src>

<mosaic_0001>
module attributes {stable_mosaic.version = 11 : i64} {
  func.func @_linear3_kernel(%arg0: i32, %arg1: memref<3x8x128xf32, #tpu.memory_space<vmem>>, %arg2: memref<3x3xf32, #tpu.memory_space<smem>>, %arg3: memref<3xf32, #tpu.memory_space<smem>>, %arg4: memref<3x8x128xf32, #tpu.memory_space<vmem>>) attributes {dimension_semantics = [#tpu.dimension_semantics<parallel>], iteration_bounds = array<i64: 1>, scalar_prefetch = 0 : i64, scratch_operands = 0 : i64, tpu.core_type = #tpu.core_type<tc>, window_params = [{transform_indices = @transform_0, window_bounds = array<i64: 3, 8, 128>}, {transform_indices = @transform_1, window_bounds = array<i64: 3, 3>}, {transform_indices = @transform_2, window_bounds = array<i64: 3>}, {transform_indices = @transform_3, window_bounds = array<i64: 3, 8, 128>}]} {
    %c0 = arith.constant 0 : index
    %c0_0 = arith.constant 0 : index
    %c0_1 = arith.constant 0 : index
    %0 = vector.load %arg1[%c0, %c0_0, %c0_1] : memref<3x8x128xf32, #tpu.memory_space<vmem>>, vector<1x8x128xf32>
    %1 = vector.shape_cast %0 : vector<1x8x128xf32> to vector<8x128xf32>
    %c1 = arith.constant 1 : index
    %c0_2 = arith.constant 0 : index
    %c0_3 = arith.constant 0 : index
    %2 = vector.load %arg1[%c1, %c0_2, %c0_3] : memref<3x8x128xf32, #tpu.memory_space<vmem>>, vector<1x8x128xf32>
    %3 = vector.shape_cast %2 : vector<1x8x128xf32> to vector<8x128xf32>
    %c2 = arith.constant 2 : index
    %c0_4 = arith.constant 0 : index
    %c0_5 = arith.constant 0 : index
    %4 = vector.load %arg1[%c2, %c0_4, %c0_5] : memref<3x8x128xf32, #tpu.memory_space<vmem>>, vector<1x8x128xf32>
    %5 = vector.shape_cast %4 : vector<1x8x128xf32> to vector<8x128xf32>
    %c0_6 = arith.constant 0 : index
    %c0_7 = arith.constant 0 : index
    %6 = memref.load %arg2[%c0_6, %c0_7] : memref<3x3xf32, #tpu.memory_space<smem>>
    %7 = vector.broadcast %6 : f32 to vector<8x128xf32>
    %8 = arith.mulf %7, %1 : vector<8x128xf32>
    %c0_8 = arith.constant 0 : index
    %c1_9 = arith.constant 1 : index
    %9 = memref.load %arg2[%c0_8, %c1_9] : memref<3x3xf32, #tpu.memory_space<smem>>
    %10 = vector.broadcast %9 : f32 to vector<8x128xf32>
    %11 = arith.mulf %10, %3 : vector<8x128xf32>
    %12 = arith.addf %8, %11 : vector<8x128xf32>
    %c0_10 = arith.constant 0 : index
    %c2_11 = arith.constant 2 : index
    %13 = memref.load %arg2[%c0_10, %c2_11] : memref<3x3xf32, #tpu.memory_space<smem>>
    %14 = vector.broadcast %13 : f32 to vector<8x128xf32>
    %15 = arith.mulf %14, %5 : vector<8x128xf32>
    %16 = arith.addf %12, %15 : vector<8x128xf32>
    %c0_12 = arith.constant 0 : index
    %17 = memref.load %arg3[%c0_12] : memref<3xf32, #tpu.memory_space<smem>>
    %18 = vector.broadcast %17 : f32 to vector<8x128xf32>
    %19 = arith.addf %16, %18 : vector<8x128xf32>
    %c0_13 = arith.constant 0 : index
    %c0_14 = arith.constant 0 : index
    %c0_15 = arith.constant 0 : index
    %20 = vector.load %arg4[%c0_13, %c0_14, %c0_15] : memref<3x8x128xf32, #tpu.memory_space<vmem>>, vector<1x8x128xf32>
    %21 = vector.shape_cast %20 : vector<1x8x128xf32> to vector<8x128xf32>
    %22 = vector.shape_cast %19 : vector<8x128xf32> to vector<1x8x128xf32>
    tpu.vector_store %arg4[%c0_13, %c0_14, %c0_15], %22 {strides = array<i32>} : memref<3x8x128xf32, #tpu.memory_space<vmem>>, vector<1x8x128xf32>,
    %c1_16 = arith.constant 1 : index
    %c0_17 = arith.constant 0 : index
    %23 = memref.load %arg2[%c1_16, %c0_17] : memref<3x3xf32, #tpu.memory_space<smem>>
    %24 = vector.broadcast %23 : f32 to vector<8x128xf32>
    %25 = arith.mulf %24, %1 : vector<8x128xf32>
    %c1_18 = arith.constant 1 : index
    %c1_19 = arith.constant 1 : index
    %26 = memref.load %arg2[%c1_18, %c1_19] : memref<3x3xf32, #tpu.memory_space<smem>>
    %27 = vector.broadcast %26 : f32 to vector<8x128xf32>
    %28 = arith.mulf %27, %3 : vector<8x128xf32>
    %29 = arith.addf %25, %28 : vector<8x128xf32>
    %c1_20 = arith.constant 1 : index
    %c2_21 = arith.constant 2 : index
    %30 = memref.load %arg2[%c1_20, %c2_21] : memref<3x3xf32, #tpu.memory_space<smem>>
    %31 = vector.broadcast %30 : f32 to vector<8x128xf32>
    %32 = arith.mulf %31, %5 : vector<8x128xf32>
    %33 = arith.addf %29, %32 : vector<8x128xf32>
    %c1_22 = arith.constant 1 : index
    %34 = memref.load %arg3[%c1_22] : memref<3xf32, #tpu.memory_space<smem>>
    %35 = vector.broadcast %34 : f32 to vector<8x128xf32>
    %36 = arith.addf %33, %35 : vector<8x128xf32>
    %c1_23 = arith.constant 1 : index
    %c0_24 = arith.constant 0 : index
    %c0_25 = arith.constant 0 : index
    %37 = vector.load %arg4[%c1_23, %c0_24, %c0_25] : memref<3x8x128xf32, #tpu.memory_space<vmem>>, vector<1x8x128xf32>
    %38 = vector.shape_cast %37 : vector<1x8x128xf32> to vector<8x128xf32>
    %39 = vector.shape_cast %36 : vector<8x128xf32> to vector<1x8x128xf32>
    tpu.vector_store %arg4[%c1_23, %c0_24, %c0_25], %39 {strides = array<i32>} : memref<3x8x128xf32, #tpu.memory_space<vmem>>, vector<1x8x128xf32>,
    %c2_26 = arith.constant 2 : index
    %c0_27 = arith.constant 0 : index
    %40 = memref.load %arg2[%c2_26, %c0_27] : memref<3x3xf32, #tpu.memory_space<smem>>
    %41 = vector.broadcast %40 : f32 to vector<8x128xf32>
    %42 = arith.mulf %41, %1 : vector<8x128xf32>
    %c2_28 = arith.constant 2 : index
    %c1_29 = arith.constant 1 : index
    %43 = memref.load %arg2[%c2_28, %c1_29] : memref<3x3xf32, #tpu.memory_space<smem>>
    %44 = vector.broadcast %43 : f32 to vector<8x128xf32>
    %45 = arith.mulf %44, %3 : vector<8x128xf32>
    %46 = arith.addf %42, %45 : vector<8x128xf32>
    %c2_30 = arith.constant 2 : index
    %c2_31 = arith.constant 2 : index
    %47 = memref.load %arg2[%c2_30, %c2_31] : memref<3x3xf32, #tpu.memory_space<smem>>
    %48 = vector.broadcast %47 : f32 to vector<8x128xf32>
    %49 = arith.mulf %48, %5 : vector<8x128xf32>
    %50 = arith.addf %46, %49 : vector<8x128xf32>
    %c2_32 = arith.constant 2 : index
    %51 = memref.load %arg3[%c2_32] : memref<3xf32, #tpu.memory_space<smem>>
    %52 = vector.broadcast %51 : f32 to vector<8x128xf32>
    %53 = arith.addf %50, %52 : vector<8x128xf32>
    %c2_33 = arith.constant 2 : index
    %c0_34 = arith.constant 0 : index
    %c0_35 = arith.constant 0 : index
    %54 = vector.load %arg4[%c2_33, %c0_34, %c0_35] : memref<3x8x128xf32, #tpu.memory_space<vmem>>, vector<1x8x128xf32>
    %55 = vector.shape_cast %54 : vector<1x8x128xf32> to vector<8x128xf32>
    %56 = vector.shape_cast %53 : vector<8x128xf32> to vector<1x8x128xf32>
    tpu.vector_store %arg4[%c2_33, %c0_34, %c0_35], %56 {strides = array<i32>} : memref<3x8x128xf32, #tpu.memory_space<vmem>>, vector<1x8x128xf32>,
    return
  }
  func.func @transform_0(%arg0: i32) -> (i32, i32, i32) {
    %c0_i32 = arith.constant 0 : i32
    %c0_i32_0 = arith.constant 0 : i32
    %c0_i32_1 = arith.constant 0 : i32
    return %c0_i32, %arg0, %c0_i32_0 : i32, i32, i32
  }
  func.func @transform_1(%arg0: i32) -> (i32, i32) {
    %c0_i32 = arith.constant 0 : i32
    %c0_i32_0 = arith.constant 0 : i32
    %c0_i32_1 = arith.constant 0 : i32
    return %c0_i32, %c0_i32_0 : i32, i32
  }
  func.func @transform_2(%arg0: i32) -> i32 {
    %c0_i32 = arith.constant 0 : i32
    %c0_i32_0 = arith.constant 0 : i32
    return %c0_i32 : i32
  }
  func.func @transform_3(%arg0: i32) -> (i32, i32, i32) {
    %c0_i32 = arith.constant 0 : i32
    %c0_i32_0 = arith.constant 0 : i32
    %c0_i32_1 = arith.constant 0 : i32
    return %c0_i32, %arg0, %c0_i32_0 : i32, i32, i32
  }
}

</mosaic_0001>

<llo_original>
// kernel: tpu_custom_call.1
$region0: #{tpu_custom_call.1}
  #allocation0 [shape = 'u32[]', space=smem, size = 0x4, offset = 0x4, fixed_abs, tag = 'smem constant byte address 0x4 - core index']
  #allocation1 [shape = 'u32[144,128]{1,0:T(1,128)}', space=vmem, size = 0x12000, scoped, tag = 'internal scratch']
  %s0 = inlined_call_operand.hbm [shape: f32[3,8,128], index: 0, kind: input, shape index: {}]
  %s1 = inlined_call_operand.hbm [shape: f32[3,3], index: 1, kind: input, shape index: {}]
  %s2 = inlined_call_operand.vmem [shape: f32[3], index: 2, kind: input, shape index: {}]
  %s3 = inlined_call_operand.hbm [shape: f32[3,8,128], index: 3, kind: output, shape index: {}]
  %s4 = sld [smem:[#allocation0]]
  $region34: #{tpu_custom_call.1} parent=0
    _
  %s6 = ssub.s32 1, %s4
  %s7 = scalar_select 0, %s6, %s4
  $region1: #{tpu_custom_call.1} parent=0
    #allocation2 [shape = 'u8[12288]{0}', space=vmem, size = 0x3000, scoped, tag = 'input window, operand 0, single buffered']
    #allocation3 [shape = 's32[1]{0}', space=sflag, size = 0x4, scoped, tag = 'scoped memory for tpu_custom_call.1']
    #allocation4 [shape = 's32[1]{0}', space=sflag, size = 0x4, scoped, tag = 'scoped memory for tpu_custom_call.1']
    #allocation5 [shape = 's32[1]{0}', space=sflag, size = 0x4, scoped, tag = 'scoped memory for tpu_custom_call.1']
    #allocation6 [shape = 's32[1]{0}', space=sflag, size = 0x4, scoped, tag = 'scoped memory for tpu_custom_call.1']
    #allocation7 [shape = 'u8[2048]{0}', space=smem, size = 0x800, scoped, tag = 'input window, operand 1, single buffered']
    #allocation8 [shape = 'u8[512]{0}', space=smem, size = 0x200, scoped, tag = 'input window, operand 2, single buffered']
    #allocation9 [shape = 'u8[12288]{0}', space=vmem, size = 0x3000, scoped, tag = 'output window, operand 0, single buffered']
    %8 = vsyncpa [#allocation3], 0
    %9 = vsyncpa [#allocation5], 0
    %10 = vsyncpa [#allocation6], 0
    %11 = vsyncpa [#allocation4], 0
    // Predicated region
    $region2: #{tpu_custom_call.1} parent=1 // pred_check
      _
    $region3: #{tpu_custom_call.1} parent=1 // pred_check_branch
      %13 = sbr.rel (0) target = $region5
    $region4: #{tpu_custom_call.1} parent=1 // pred_region
      %s15 = ssub.s32 384, 384
      %16 = vsyncadd [#allocation3], %s15
      %s17 = sshll.u32 [#allocation2], 4
      %s18 = int_to_ptr.vmem [resolvable:$true] %s17
      %23 = dma.hbm_to_vmem [thread:$0]  %s0, 384, %s18, [#allocation3], 128, 128, 8
    $region5: #{tpu_custom_call.1} parent=1 // pred_fallthru
      _
    // Predicated region
    $region6: #{tpu_custom_call.1} parent=1 // pred_check
      _
    $region7: #{tpu_custom_call.1} parent=1 // pred_check_branch
      %25 = sbr.rel (0) target = $region9
    $region8: #{tpu_custom_call.1} parent=1 // pred_region
      %s27 = ssub.s32 64, 64
      %28 = vsyncadd [#allocation5], %s27
      %31 = dma.hbm_to_smem %s1, 64, [#allocation7], [#allocation5]
    $region9: #{tpu_custom_call.1} parent=1 // pred_fallthru
      _
    // Predicated region
    $region10: #{tpu_custom_call.1} parent=1 // pred_check
      _
    $region11: #{tpu_custom_call.1} parent=1 // pred_check_branch
      %33 = sbr.rel (0) target = $region13
    $region12: #{tpu_custom_call.1} parent=1 // pred_region
      %s35 = ssub.s32 16, 16
      %36 = vsyncadd [#allocation6], %s35
      %s38 = sshll.u32 %s2, 4
      %s39 = int_to_ptr.vmem [resolvable:$true] %s38
      %41 = dma.vmem_to_smem %s39, 16, [#allocation8], [#allocation6]
    $region13: #{tpu_custom_call.1} parent=1 // pred_fallthru
      _
    // Predicated region
    $region14: #{tpu_custom_call.1} parent=1 // pred_check
      _
    $region15: #{tpu_custom_call.1} parent=1 // pred_check_branch
      %43 = sbr.rel (0) target = $region17
    $region16: #{tpu_custom_call.1} parent=1 // pred_region
      %44 = dma.done [#allocation3], 384
    $region17: #{tpu_custom_call.1} parent=1 // pred_fallthru
      _
    // Predicated region
    $region18: #{tpu_custom_call.1} parent=1 // pred_check
      _
    $region19: #{tpu_custom_call.1} parent=1 // pred_check_branch
      %46 = sbr.rel (0) target = $region21
    $region20: #{tpu_custom_call.1} parent=1 // pred_region
      %47 = dma.done [#allocation5], 64
    $region21: #{tpu_custom_call.1} parent=1 // pred_fallthru
      _
    // Predicated region
    $region22: #{tpu_custom_call.1} parent=1 // pred_check
      _
    $region23: #{tpu_custom_call.1} parent=1 // pred_check_branch
      %49 = sbr.rel (0) target = $region25
    $region24: #{tpu_custom_call.1} parent=1 // pred_region
      %50 = dma.done [#allocation6], 16
    $region25: #{tpu_custom_call.1} parent=1 // pred_fallthru
      _
    %51 = sfence
    %v52 = vld [vmem:[#allocation2] sm:$0xff]
    %s53 = scalar_lea.vmem [#allocation2], 8
    %v54 = vld [vmem:[%s53] sm:$0xff]
    %s55 = scalar_lea.vmem [#allocation2], 16
    %v56 = vld [vmem:[%s55] sm:$0xff]
    %s57 = sld [smem:[#allocation7]]
    %v58 = vstv %s57
    %v59 = vmul.f32 %v58, %v52
    %s60 = sld [smem:[#allocation7 + $0x1]]
    %v61 = vstv %s60
    %v62 = vmul.f32 %v61, %v54
    %v63 = vadd.f32 %v59, %v62
    %s64 = sld [smem:[#allocation7 + $0x2]]
    %v65 = vstv %s64
    %v66 = vmul.f32 %v65, %v56
    %v67 = vadd.f32 %v63, %v66
    %s68 = sld [smem:[#allocation8]]
    %v69 = vstv %s68
    %v70 = vadd.f32 %v67, %v69
    %71 = vst [vmem:[#allocation9] sm:$0xff] %v70
    %s72 = sld [smem:[#allocation7 + $0x80]]
    %v73 = vstv %s72
    %v74 = vmul.f32 %v73, %v52
    %s75 = sld [smem:[#allocation7 + $0x81]]
    %v76 = vstv %s75
    %v77 = vmul.f32 %v76, %v54
    %v78 = vadd.f32 %v74, %v77
    %s79 = sld [smem:[#allocation7 + $0x82]]
    %v80 = vstv %s79
    %v81 = vmul.f32 %v80, %v56
    %v82 = vadd.f32 %v78, %v81
    %s83 = sld [smem:[#allocation8 + $0x1]]
    %v84 = vstv %s83
    %v85 = vadd.f32 %v82, %v84
    %s86 = scalar_lea.vmem [#allocation9], 8
    %87 = vst [vmem:[%s86] sm:$0xff] %v85
    %s88 = sld [smem:[#allocation7 + $0x100]]
    %v89 = vstv %s88
    %v90 = vmul.f32 %v89, %v52
    %s91 = sld [smem:[#allocation7 + $0x101]]
    %v92 = vstv %s91
    %v93 = vmul.f32 %v92, %v54
    %v94 = vadd.f32 %v90, %v93
    %s95 = sld [smem:[#allocation7 + $0x102]]
    %v96 = vstv %s95
    %v97 = vmul.f32 %v96, %v56
    %v98 = vadd.f32 %v94, %v97
    %s99 = sld [smem:[#allocation8 + $0x2]]
    %v100 = vstv %s99
    %v101 = vadd.f32 %v98, %v100
    %s102 = scalar_lea.vmem [#allocation9], 16
    %103 = vst [vmem:[%s102] sm:$0xff] %v101
    // Predicated region
    $region26: #{tpu_custom_call.1} parent=1 // pred_check
      _
    $region27: #{tpu_custom_call.1} parent=1 // pred_check_branch
      %105 = sbr.rel (0) target = $region29
    $region28: #{tpu_custom_call.1} parent=1 // pred_region
      %s107 = ssub.s32 384, 384
      %108 = vsyncadd [#allocation4], %s107
      %s109 = sshll.u32 [#allocation9], 4
      %s110 = int_to_ptr.vmem [resolvable:$true] %s109
      %115 = dma.vmem_to_hbm [thread:$0]  %s110, 384, %s3, [#allocation4], 128, 128, 8
    $region29: #{tpu_custom_call.1} parent=1 // pred_fallthru
      _
    // Predicated region
    $region30: #{tpu_custom_call.1} parent=1 // pred_check
      _
    $region31: #{tpu_custom_call.1} parent=1 // pred_check_branch
      %117 = sbr.rel (0) target = $region33
    $region32: #{tpu_custom_call.1} parent=1 // pred_region
      %118 = dma.done [#allocation4], 384
    $region33: #{tpu_custom_call.1} parent=1 // pred_fallthru
      _
    %119 = vsyncpa [#allocation3], 1
    %120 = vsyncpa [#allocation4], 1
    %121 = vsyncpa [#allocation5], 1
    %122 = vsyncpa [#allocation6], 1

</llo_original>
